<compile_context>
chip_gen: v6e
topology: v6e:2x2x1
jax: 0.10.0
libtpu: 0.0.40
codegen_flags: <defaults>
</compile_context>

<pallas_src>
import numpy as np
import jax
import jax.numpy as jnp
from jax import lax
from jax.experimental import pallas as pl
from jax.experimental.pallas import tpu as pltpu

# ----- module configuration (matches `example_filter` in the spec) -----
SPAN_IN_SYMBOLS = 4
SAMPLES_PER_SYMBOL = 2
BETA = 0.25

LANE = 128                              # TPU lane tile (last-dim granularity)
TB_CANDIDATES = (256, 128, 64, 32, 16, 8)
VMEM_BUDGET_BYTES = 24 * 1024 * 1024    # double-buffered in+out tiles stay well
                                        # under v7x's 64 MiB VMEM


# ---------------- filter coefficient construction (module __init__) ----------------

def filter_length(span_in_symbols, samples_per_symbol):
    l = span_in_symbols * samples_per_symbol
    return 2 * (l // 2) + 1


def sampling_times(length, samples_per_symbol):
    n_min = -(length // 2)
    t = np.arange(n_min, n_min + length, dtype=np.float32)
    return t / samples_per_symbol


def raised_cosine(t, symbol_duration, beta):
    """Raised-cosine impulse response (same formula as the PyTorch module)."""
    h = np.zeros([len(t)], np.float32)
    for i, tt in enumerate(t):
        tt = np.abs(tt)
        if beta > 0 and tt - np.abs(symbol_duration / 2 / beta) == 0:
            h[i] = np.pi / 4 / symbol_duration * np.sinc(1 / 2 / beta)
        else:
            h[i] = (1.0 / symbol_duration * np.sinc(tt / symbol_duration)
                    * np.cos(np.pi * beta * tt / symbol_duration)
                    / (1 - (2 * beta * tt / symbol_duration) ** 2))
    return h


def hann_window(length):
    # sionna-style (periodic) Hann window: w[n] = sin^2(pi * n / length)
    n = np.arange(length, dtype=np.float32)
    return (np.sin(np.pi * n / length) ** 2).astype(np.float32)


def build_coefficients():
    """coefficients property: raised cosine -> window -> unit-energy normalize."""
    k = filter_length(SPAN_IN_SYMBOLS, SAMPLES_PER_SYMBOL)
    t = sampling_times(k, SAMPLES_PER_SYMBOL)
    h = raised_cosine(t, 1.0, BETA).astype(np.float32)
    h = h * hann_window(k)
    energy = np.sum(np.square(np.abs(h)))
    h = h / np.sqrt(energy)
    return h.astype(np.float32)


# ---------------- Pallas kernel ----------------

def _make_conv_same_kernel(taps, n_real):
    """Kernel for  y[b, n] = sum_j taps[j] * x[b, n + (K-1)//2 - j]  ('same', K odd).

    taps    : python-float filter coefficients (trace-time constants)
    n_real  : logical length of the conv axis (block may be lane-padded beyond it)
    """
    k = len(taps)
    pad = (k - 1) // 2

    def kernel(x_ref, y_ref):
        x = x_ref[...]                                  # (TB, N_blk) f32 — single load
        tb, n_blk = x.shape
        col = lax.broadcasted_iota(jnp.int32, (tb, n_blk), 1)
        acc = jnp.zeros((tb, n_blk), jnp.float32)
        # Static unrolled MAC over K taps.  Shifts via pltpu.roll (XLU) + masked
        # wrap-around so no zero-padded copy of x is ever materialized in HBM.
        for j, c in enumerate(taps):
            if c == 0.0:                                # skip exactly-zero taps
                continue
            m = pad - j                                 # contribution of x[n + m]
            if m == 0:
                shifted = x
            elif m > 0:
                # out[n] = x[n + m]; zero where n + m >= n_real (right border / wrap)
                shifted = pltpu.roll(x, shift=n_blk - m, axis=1)
                shifted = jnp.where(col < (n_real - m), shifted, 0.0)
            else:
                d = -m
                # out[n] = x[n - d]; zero where n < d (left border / wrap)
                shifted = pltpu.roll(x, shift=d, axis=1)
                shifted = jnp.where(col >= d, shifted, 0.0)
            acc = acc + c * shifted
        y_ref[...] = acc

    return kernel


def _choose_batch_tile(b, n_blk):
    """Largest batch tile that divides B and keeps double-buffered in+out f32
    blocks within the VMEM budget (sized for v7x's 64 MiB VMEM)."""
    bytes_per_row = 4 * n_blk
    cap = max(8, VMEM_BUDGET_BYTES // (4 * bytes_per_row))   # in+out, x2 buffers
    for tb in TB_CANDIDATES:
        if tb <= cap and b % tb == 0:
            return tb
    # Fall back to a single whole-batch block (block dim == full array dim is
    # always legal); fine for small batches like the module example.
    # TODO(synk): rows too long for the VMEM budget need an N-tiled halo variant.
    return b


def rc_filter_same(x, h):
    """Filter.forward(x, padding='same') for real x of shape [B, N], float32."""
    h = np.asarray(h, np.float32)
    k = h.shape[0]
    assert k % 2 == 1, "'same' centering below assumes an odd filter length"
    # TODO(synk): trainable coefficients would need the taps passed as an SMEM
    # operand instead of trace-time constants.
    taps = tuple(float(v) for v in h)

    b, n = x.shape
    n_blk = max(LANE, ((n + LANE - 1) // LANE) * LANE)
    # Lane-dense blocks: only a ragged N needs a right-only pad up to the lane
    # tile; lane-aligned N takes a zero-copy path.  The K-1 convolution border
    # is always handled in-kernel by masking (no jnp.pad halo round-trip).
    x_in = x if n_blk == n else jnp.pad(x, ((0, 0), (0, n_blk - n)))

    tb = _choose_batch_tile(b, n_blk)
    grid = (b // tb,)

    y = pl.pallas_call(
        _make_conv_same_kernel(taps, n),
        out_shape=jax.ShapeDtypeStruct((b, n_blk), jnp.float32),
        grid=grid,
        in_specs=[pl.BlockSpec((tb, n_blk), lambda i: (i, 0))],
        out_specs=pl.BlockSpec((tb, n_blk), lambda i: (i, 0)),
        compiler_params=pltpu.CompilerParams(
            dimension_semantics=("parallel",),          # megacore-shard batch tiles
            vmem_limit_bytes=32 * 1024 * 1024,
        ),
    )(x_in)
    return y if n_blk == n else y[:, :n]

    # TODO(synk): complex dtypes, conjugate=True, and 'full'/'valid' padding modes
    # of Filter.forward are not implemented; only the float32 'same' path is.
    # TODO(synk): optional bf16 I/O (f32 accumulate) would halve HBM traffic for
    # this memory-bound kernel if the signal tolerates it.


if __name__ == "__main__":
    h_np = build_coefficients()           # K = 9 taps (asymmetric: periodic Hann)

    # Case 1: the module's example usage, x of shape [10, 20].
    x1 = jax.random.normal(jax.random.PRNGKey(0), (10, 20), dtype=jnp.float32)
    y1 = jax.block_until_ready(rc_filter_same(x1, h_np))
    x1_np = np.asarray(x1)
    ref1 = np.stack([np.convolve(x1_np[i], h_np, mode="same")
                     for i in range(x1_np.shape[0])])
    np.testing.assert_allclose(np.asarray(y1), ref1, rtol=1e-5, atol=1e-5)

    # Case 2: lane-dense, multi-step pipelined grid (two (256, 1024) batch tiles,
    # no wrapper pad since N is a multiple of 128).
    x2 = jax.random.normal(jax.random.PRNGKey(1), (512, 1024), dtype=jnp.float32)
    y2 = jax.block_until_ready(rc_filter_same(x2, h_np))
    x2_np = np.asarray(x2)
    ref2 = np.stack([np.convolve(x2_np[i], h_np, mode="same")
                     for i in range(x2_np.shape[0])])
    np.testing.assert_allclose(np.asarray(y2), ref2, rtol=1e-5, atol=1e-5)

    print("KERNEL_OK")
</pallas_src>

<mosaic_0001>
module attributes {stable_mosaic.version = 11 : i64} {
  func.func @kernel(%arg0: i32, %arg1: memref<10x128xf32, #tpu.memory_space<vmem>>, %arg2: memref<10x128xf32, #tpu.memory_space<vmem>>) attributes {dimension_semantics = [#tpu.dimension_semantics<parallel>], iteration_bounds = array<i64: 1>, scalar_prefetch = 0 : i64, scratch_operands = 0 : i64, tpu.core_type = #tpu.core_type<tc>, window_params = [{transform_indices = @transform_0, window_bounds = array<i64: 10, 128>}, {transform_indices = @transform_1, window_bounds = array<i64: 10, 128>}]} {
    %c0 = arith.constant 0 : index
    %c0_0 = arith.constant 0 : index
    %0 = vector.load %arg1[%c0, %c0_0] : memref<10x128xf32, #tpu.memory_space<vmem>>, vector<10x128xf32>
    %1 = tpu.iota {dimensions = array<i32: 1>} : vector<10x128xi32>
    %cst = arith.constant 0.000000e+00 : f32
    %2 = vector.broadcast %cst : f32 to vector<10x128xf32>
    %c125_i32 = arith.constant 125 : i32
    %3 = tpu.dynamic_rotate %0 by %c125_i32 dim 1 : vector<10x128xf32>, i32 -> vector<10x128xf32>
    %c17_i32 = arith.constant 17 : i32
    %4 = vector.broadcast %c17_i32 : i32 to vector<10x128xi32>
    %5 = arith.cmpi slt, %1, %4 : vector<10x128xi32>
    %cst_1 = arith.constant 0.000000e+00 : f32
    %6 = vector.broadcast %cst_1 : f32 to vector<10x128xf32>
    %7 = arith.select %5, %3, %6 : vector<10x128xi1>, vector<10x128xf32>
    %cst_2 = arith.constant -0.0175051466 : f32
    %8 = vector.broadcast %cst_2 : f32 to vector<10x128xf32>
    %9 = arith.mulf %8, %7 : vector<10x128xf32>
    %10 = arith.addf %2, %9 : vector<10x128xf32>
    %c126_i32 = arith.constant 126 : i32
    %11 = tpu.dynamic_rotate %0 by %c126_i32 dim 1 : vector<10x128xf32>, i32 -> vector<10x128xf32>
    %c18_i32 = arith.constant 18 : i32
    %12 = vector.broadcast %c18_i32 : i32 to vector<10x128xi32>
    %13 = arith.cmpi slt, %1, %12 : vector<10x128xi32>
    %cst_3 = arith.constant 0.000000e+00 : f32
    %14 = vector.broadcast %cst_3 : f32 to vector<10x128xf32>
    %15 = arith.select %13, %11, %14 : vector<10x128xi1>, vector<10x128xf32>
    %cst_4 = arith.constant -8.73927241E-9 : f32
    %16 = vector.broadcast %cst_4 : f32 to vector<10x128xf32>
    %17 = arith.mulf %16, %15 : vector<10x128xf32>
    %18 = arith.addf %10, %17 : vector<10x128xf32>
    %c127_i32 = arith.constant 127 : i32
    %19 = tpu.dynamic_rotate %0 by %c127_i32 dim 1 : vector<10x128xf32>, i32 -> vector<10x128xf32>
    %c19_i32 = arith.constant 19 : i32
    %20 = vector.broadcast %c19_i32 : i32 to vector<10x128xi32>
    %21 = arith.cmpi slt, %1, %20 : vector<10x128xi32>
    %cst_5 = arith.constant 0.000000e+00 : f32
    %22 = vector.broadcast %cst_5 : f32 to vector<10x128xf32>
    %23 = arith.select %21, %19, %22 : vector<10x128xi1>, vector<10x128xf32>
    %cst_6 = arith.constant 0.379338801 : f32
    %24 = vector.broadcast %cst_6 : f32 to vector<10x128xf32>
    %25 = arith.mulf %24, %23 : vector<10x128xf32>
    %26 = arith.addf %18, %25 : vector<10x128xf32>
    %cst_7 = arith.constant 0.781888365 : f32
    %27 = vector.broadcast %cst_7 : f32 to vector<10x128xf32>
    %28 = arith.mulf %27, %0 : vector<10x128xf32>
    %29 = arith.addf %26, %28 : vector<10x128xf32>
    %c1_i32 = arith.constant 1 : i32
    %30 = tpu.dynamic_rotate %0 by %c1_i32 dim 1 : vector<10x128xf32>, i32 -> vector<10x128xf32>
    %c1_i32_8 = arith.constant 1 : i32
    %31 = vector.broadcast %c1_i32_8 : i32 to vector<10x128xi32>
    %32 = arith.cmpi sge, %1, %31 : vector<10x128xi32>
    %cst_9 = arith.constant 0.000000e+00 : f32
    %33 = vector.broadcast %cst_9 : f32 to vector<10x128xf32>
    %34 = arith.select %32, %30, %33 : vector<10x128xi1>, vector<10x128xf32>
    %cst_10 = arith.constant 0.49053371 : f32
    %35 = vector.broadcast %cst_10 : f32 to vector<10x128xf32>
    %36 = arith.mulf %35, %34 : vector<10x128xf32>
    %37 = arith.addf %29, %36 : vector<10x128xf32>
    %c2_i32 = arith.constant 2 : i32
    %38 = tpu.dynamic_rotate %0 by %c2_i32 dim 1 : vector<10x128xf32>, i32 -> vector<10x128xf32>
    %c2_i32_11 = arith.constant 2 : i32
    %39 = vector.broadcast %c2_i32_11 : i32 to vector<10x128xi32>
    %40 = arith.cmpi sge, %1, %39 : vector<10x128xi32>
    %cst_12 = arith.constant 0.000000e+00 : f32
    %41 = vector.broadcast %cst_12 : f32 to vector<10x128xf32>
    %42 = arith.select %40, %38, %41 : vector<10x128xi1>, vector<10x128xf32>
    %cst_13 = arith.constant -1.58635913E-8 : f32
    %43 = vector.broadcast %cst_13 : f32 to vector<10x128xf32>
    %44 = arith.mulf %43, %42 : vector<10x128xf32>
    %45 = arith.addf %37, %44 : vector<10x128xf32>
    %c3_i32 = arith.constant 3 : i32
    %46 = tpu.dynamic_rotate %0 by %c3_i32 dim 1 : vector<10x128xf32>, i32 -> vector<10x128xf32>
    %c3_i32_14 = arith.constant 3 : i32
    %47 = vector.broadcast %c3_i32_14 : i32 to vector<10x128xi32>
    %48 = arith.cmpi sge, %1, %47 : vector<10x128xi32>
    %cst_15 = arith.constant 0.000000e+00 : f32
    %49 = vector.broadcast %cst_15 : f32 to vector<10x128xf32>
    %50 = arith.select %48, %46, %49 : vector<10x128xi1>, vector<10x128xf32>
    %cst_16 = arith.constant -0.0618296936 : f32
    %51 = vector.broadcast %cst_16 : f32 to vector<10x128xf32>
    %52 = arith.mulf %51, %50 : vector<10x128xf32>
    %53 = arith.addf %45, %52 : vector<10x128xf32>
    %c4_i32 = arith.constant 4 : i32
    %54 = tpu.dynamic_rotate %0 by %c4_i32 dim 1 : vector<10x128xf32>, i32 -> vector<10x128xf32>
    %c4_i32_17 = arith.constant 4 : i32
    %55 = vector.broadcast %c4_i32_17 : i32 to vector<10x128xi32>
    %56 = arith.cmpi sge, %1, %55 : vector<10x128xi32>
    %cst_18 = arith.constant 0.000000e+00 : f32
    %57 = vector.broadcast %cst_18 : f32 to vector<10x128xf32>
    %58 = arith.select %56, %54, %57 : vector<10x128xi1>, vector<10x128xf32>
    %cst_19 = arith.constant -2.88732521E-18 : f32
    %59 = vector.broadcast %cst_19 : f32 to vector<10x128xf32>
    %60 = arith.mulf %59, %58 : vector<10x128xf32>
    %61 = arith.addf %53, %60 : vector<10x128xf32>
    %c0_20 = arith.constant 0 : index
    %c0_21 = arith.constant 0 : index
    %62 = vector.load %arg2[%c0_20, %c0_21] : memref<10x128xf32, #tpu.memory_space<vmem>>, vector<10x128xf32>
    tpu.vector_store %arg2[%c0_20, %c0_21], %61 {strides = array<i32>} : memref<10x128xf32, #tpu.memory_space<vmem>>, vector<10x128xf32>,
    return
  }
  func.func @transform_0(%arg0: i32) -> (i32, i32) {
    %c0_i32 = arith.constant 0 : i32
    %c0_i32_0 = arith.constant 0 : i32
    return %arg0, %c0_i32 : i32, i32
  }
  func.func @transform_1(%arg0: i32) -> (i32, i32) {
    %c0_i32 = arith.constant 0 : i32
    %c0_i32_0 = arith.constant 0 : i32
    return %arg0, %c0_i32 : i32, i32
  }
}

</mosaic_0001>

<llo_original>
// kernel: tpu_custom_call.1
$region0: #{tpu_custom_call.1}
  #allocation0 [shape = 'u32[]', space=smem, size = 0x4, offset = 0x4, fixed_abs, tag = 'smem constant byte address 0x4 - core index']
  #allocation1 [shape = 'u32[144,128]{1,0:T(1,128)}', space=vmem, size = 0x12000, scoped, tag = 'internal scratch']
  %s0 = inlined_call_operand.hbm [shape: f32[10,128], index: 0, kind: input, shape index: {}]
  %s1 = inlined_call_operand.hbm [shape: f32[10,128], index: 1, kind: output, shape index: {}]
  %s2 = sld [smem:[#allocation0]]
  $region18: #{tpu_custom_call.1} parent=0
    _
  %s4 = ssub.s32 1, %s2
  %s5 = scalar_select 0, %s4, %s2
  $region1: #{tpu_custom_call.1} parent=0
    #allocation2 [shape = 'u8[8192]{0}', space=vmem, size = 0x2000, scoped, tag = 'input window, operand 0, single buffered']
    #allocation3 [shape = 's32[1]{0}', space=sflag, size = 0x4, scoped, tag = 'scoped memory for tpu_custom_call.1']
    #allocation4 [shape = 's32[1]{0}', space=sflag, size = 0x4, scoped, tag = 'scoped memory for tpu_custom_call.1']
    #allocation5 [shape = 'u8[8192]{0}', space=vmem, size = 0x2000, scoped, tag = 'output window, operand 0, single buffered']
    %6 = vsyncpa [#allocation3], 0
    %7 = vsyncpa [#allocation4], 0
    // Predicated region
    $region2: #{tpu_custom_call.1} parent=1 // pred_check
      _
    $region3: #{tpu_custom_call.1} parent=1 // pred_check_branch
      %9 = sbr.rel (0) target = $region5
    $region4: #{tpu_custom_call.1} parent=1 // pred_region
      %s11 = ssub.s32 256, 256
      %12 = vsyncadd [#allocation3], %s11
      %s13 = sshll.u32 [#allocation2], 4
      %s14 = int_to_ptr.vmem [resolvable:$true] %s13
      %19 = dma.hbm_to_vmem [thread:$0]  %s0, 256, %s14, [#allocation3], 128, 128, 8
    $region5: #{tpu_custom_call.1} parent=1 // pred_fallthru
      _
    // Predicated region
    $region6: #{tpu_custom_call.1} parent=1 // pred_check
      _
    $region7: #{tpu_custom_call.1} parent=1 // pred_check_branch
      %21 = sbr.rel (0) target = $region9
    $region8: #{tpu_custom_call.1} parent=1 // pred_region
      %22 = dma.done [#allocation3], 256
    $region9: #{tpu_custom_call.1} parent=1 // pred_fallthru
      _
    %v23 = vld [vmem:[#allocation2] sm:$0xff]
    %v24 = vld [vmem:[#allocation2 + $0x8] sm:$0x3]
    %v25 = vlaneseq
    %v26 = vand.u32 %v25, 127
    %27 = vrot.lane.b32.xlu0 %v23, 125
    %v28 = vpop.permute.xlu0 %27
    %29 = vrot.lane.b32.xlu0 %v24, 125
    %v30 = vpop.permute.xlu0 %29
    %vm31 = vcmp.lt.s32.totalorder %v26, 17
    %v32 = vsel %vm31, %v28, 0.0
    %v33 = vsel %vm31, %v30, 0.0
    %v34 = vmul.f32 %v32, -0.017505147
    %v35 = vmul.f32 %v33, -0.017505147
    %v36 = vadd.f32 %v34, 0.0
    %v37 = vadd.f32 %v35, 0.0
    %38 = vrot.lane.b32.xlu0 %v23, 126
    %v39 = vpop.permute.xlu0 %38
    %40 = vrot.lane.b32.xlu0 %v24, 126
    %v41 = vpop.permute.xlu0 %40
    %vm42 = vcmp.lt.s32.totalorder %v26, 18
    %v43 = vsel %vm42, %v39, 0.0
    %v44 = vsel %vm42, %v41, 0.0
    %v45 = vmul.f32 %v43, -8.739272e-09
    %v46 = vmul.f32 %v44, -8.739272e-09
    %v47 = vadd.f32 %v36, %v45
    %v48 = vadd.f32 %v37, %v46
    %49 = vrot.lane.b32.xlu0 %v23, 127
    %v50 = vpop.permute.xlu0 %49
    %51 = vrot.lane.b32.xlu0 %v24, 127
    %v52 = vpop.permute.xlu0 %51
    %vm53 = vcmp.lt.s32.totalorder %v26, 19
    %v54 = vsel %vm53, %v50, 0.0
    %v55 = vsel %vm53, %v52, 0.0
    %v56 = vmul.f32 %v54, 0.3793388
    %v57 = vmul.f32 %v55, 0.3793388
    %v58 = vadd.f32 %v47, %v56
    %v59 = vadd.f32 %v48, %v57
    %v60 = vmul.f32 %v23, 0.78188837
    %v61 = vmul.f32 %v24, 0.78188837
    %v62 = vadd.f32 %v58, %v60
    %v63 = vadd.f32 %v59, %v61
    %64 = vrot.lane.b32.xlu0 %v23, 1
    %v65 = vpop.permute.xlu0 %64
    %66 = vrot.lane.b32.xlu0 %v24, 1
    %v67 = vpop.permute.xlu0 %66
    %vm68 = vcmp.ge.s32.totalorder %v26, 1
    %v69 = vsel %vm68, %v65, 0.0
    %v70 = vsel %vm68, %v67, 0.0
    %v71 = vmul.f32 %v69, 0.4905337
    %v72 = vmul.f32 %v70, 0.4905337
    %v73 = vadd.f32 %v62, %v71
    %v74 = vadd.f32 %v63, %v72
    %75 = vrot.lane.b32.xlu0 %v23, 2
    %v76 = vpop.permute.xlu0 %75
    %77 = vrot.lane.b32.xlu0 %v24, 2
    %v78 = vpop.permute.xlu0 %77
    %vm79 = vcmp.ge.s32.totalorder %v26, 2
    %v80 = vsel %vm79, %v76, 0.0
    %v81 = vsel %vm79, %v78, 0.0
    %v82 = vmul.f32 %v80, -1.5863591e-08
    %v83 = vmul.f32 %v81, -1.5863591e-08
    %v84 = vadd.f32 %v73, %v82
    %v85 = vadd.f32 %v74, %v83
    %86 = vrot.lane.b32.xlu0 %v23, 3
    %v87 = vpop.permute.xlu0 %86
    %88 = vrot.lane.b32.xlu0 %v24, 3
    %v89 = vpop.permute.xlu0 %88
    %vm90 = vcmp.ge.s32.totalorder %v26, 3
    %v91 = vsel %vm90, %v87, 0.0
    %v92 = vsel %vm90, %v89, 0.0
    %v93 = vmul.f32 %v91, -0.061829694
    %v94 = vmul.f32 %v92, -0.061829694
    %v95 = vadd.f32 %v84, %v93
    %v96 = vadd.f32 %v85, %v94
    %97 = vrot.lane.b32.xlu0 %v23, 4
    %v98 = vpop.permute.xlu0 %97
    %99 = vrot.lane.b32.xlu0 %v24, 4
    %v100 = vpop.permute.xlu0 %99
    %vm101 = vcmp.ge.s32.totalorder %v26, 4
    %v102 = vsel %vm101, %v98, 0.0
    %v103 = vsel %vm101, %v100, 0.0
    %v104 = vmul.f32 %v102, -2.8873252e-18
    %v105 = vmul.f32 %v103, -2.8873252e-18
    %v106 = vadd.f32 %v95, %v104
    %v107 = vadd.f32 %v96, %v105
    %108 = vst [vmem:[#allocation5] sm:$0xff] %v106
    %109 = vst [vmem:[#allocation5 + $0x8] sm:$0x3] %v107
    // Predicated region
    $region10: #{tpu_custom_call.1} parent=1 // pred_check
      _
    $region11: #{tpu_custom_call.1} parent=1 // pred_check_branch
      %111 = sbr.rel (0) target = $region13
    $region12: #{tpu_custom_call.1} parent=1 // pred_region
      %s113 = ssub.s32 256, 256
      %114 = vsyncadd [#allocation4], %s113
      %s115 = sshll.u32 [#allocation5], 4
      %s116 = int_to_ptr.vmem [resolvable:$true] %s115
      %121 = dma.vmem_to_hbm [thread:$0]  %s116, 256, %s1, [#allocation4], 128, 128, 8
    $region13: #{tpu_custom_call.1} parent=1 // pred_fallthru
      _
    // Predicated region
    $region14: #{tpu_custom_call.1} parent=1 // pred_check
      _
    $region15: #{tpu_custom_call.1} parent=1 // pred_check_branch
      %123 = sbr.rel (0) target = $region17
    $region16: #{tpu_custom_call.1} parent=1 // pred_region
      %124 = dma.done [#allocation4], 256
    $region17: #{tpu_custom_call.1} parent=1 // pred_fallthru
      _
    %125 = vsyncpa [#allocation3], 1
    %126 = vsyncpa [#allocation4], 1

</llo_original>
